<compile_context>
chip_gen: v7x
topology: tpu7x:2x2x1
jax: 0.10.0
libtpu: 0.0.40
codegen_flags: <defaults>
</compile_context>

<pallas_src>
import functools

import jax
import jax.numpy as jnp
from jax.experimental import pallas as pl
from jax.experimental.pallas import tpu as pltpu


def _round_up(x: int, m: int) -> int:
    return ((x + m - 1) // m) * m


def _make_triplet_kernel(margin: float):
    margin = float(margin)

    def kernel(x_row_ref, x_col_ref, lbl_row_ref, lbl_col_ref,
               hsq_col_ref, sq_row_ref, out_ref, max_pos_ref, min_neg_ref):
        j = pl.program_id(1)

        @pl.when(j == 0)
        def _():
            max_pos_ref[...] = jnp.full(max_pos_ref.shape, -jnp.inf, jnp.float32)
            min_neg_ref[...] = jnp.full(min_neg_ref.shape, jnp.inf, jnp.float32)

        # Gram block on the MXU, contracting the feature dim of both operands
        # (no materialized transpose), f32 accumulation.
        gram = jax.lax.dot_general(
            x_row_ref[...], x_col_ref[...],
            dimension_numbers=(((1,), (1,)), ((), ())),
            preferred_element_type=jnp.float32)               # (TM, TN)

        # Mine on h = 0.5*||x_j||^2 - <x_i, x_j>.  The row term ||x_i||^2 is constant per
        # row (cannot change the arg-max/arg-min) and the x2 scale is monotone, so the full
        # d2 = 2*h + ||x_i||^2 is reconstructed only for the two selected values at finalize.
        h = hsq_col_ref[...] - gram                           # (TM, TN)

        same = lbl_row_ref[...] == lbl_col_ref[...]           # (TM, TN)

        # Padded columns carry label -1 (never a positive for real rows) and
        # hsq_col = +inf (never win the negatives min): no extra validity mask needed.
        h_pos = jnp.where(same, h, -jnp.inf)
        h_neg = jnp.where(same, jnp.inf, h)

        # Running batch-hard mining (squared-distance domain, sqrt is monotone).
        max_pos_ref[...] = jnp.maximum(max_pos_ref[...],
                                       jnp.max(h_pos, axis=1, keepdims=True))
        min_neg_ref[...] = jnp.minimum(min_neg_ref[...],
                                       jnp.min(h_neg, axis=1, keepdims=True))

        @pl.when(j == pl.num_programs(1) - 1)
        def _():
            sq_r = sq_row_ref[...]
            # clamp(min=1e-12).sqrt() applied only to the 2*TM selected values.
            d_ap = jnp.sqrt(jnp.maximum(2.0 * max_pos_ref[...] + sq_r, 1e-12))
            d_an = jnp.sqrt(jnp.maximum(2.0 * min_neg_ref[...] + sq_r, 1e-12))
            # MarginRankingLoss(margin)(d_an, d_ap, y=1) == max(0, d_ap - d_an + margin)
            out_ref[...] = jnp.maximum(d_ap - d_an + margin, 0.0)

    return kernel


def _choose_tiles(n: int, dp: int, itemsize: int):
    """Pick (tm, tn, n_pad) so double-buffered feature tiles stay VMEM-friendly on all
    TPU generations (v5e 16 MiB default scoped, v7x 64 MiB physical / 32 MiB scoped)."""
    row_bytes = dp * itemsize
    budget = 24 << 20

    # Path 1: whole column operand VMEM-resident (x streamed from HBM exactly once).
    n_pad = _round_up(n, 128)
    tm_cands = [t for t in (512, 256, 128) if n_pad % t == 0]
    # Prefer >= 2 row tiles so both v7x TensorCores get work via the "parallel" axis.
    tm = next((t for t in tm_cands if n_pad // t >= 2), tm_cands[-1])
    if 2 * (tm + n_pad) * row_bytes <= budget:
        return tm, n_pad, n_pad

    # Path 2: stream column tiles for large N (or large D).
    for tm, tn in ((512, 512), (512, 256), (256, 256), (256, 128), (128, 128)):
        if 2 * (tm + tn) * row_bytes <= budget:
            break
    # TODO(synk): feature dims too large for a single (tile, Dp) VMEM buffer would need an
    # additional K-tiled Gram accumulation; not implemented here.
    n_pad = _round_up(n, max(tm, tn))
    return tm, tn, n_pad


@functools.partial(jax.jit, static_argnames=("margin", "use_bf16_gram"))
def batch_hard_triplet_loss(inputs, targets, margin: float = 0.5,
                            use_bf16_gram: bool = False):
    """inputs: (N, D) float features; targets: (N,) integer labels. Returns scalar f32 loss."""
    n, d = inputs.shape
    dp = _round_up(d, 128)
    gram_dtype = jnp.bfloat16 if use_bf16_gram else inputs.dtype
    itemsize = jnp.dtype(gram_dtype).itemsize
    tm, tn, n_pad = _choose_tiles(n, dp, itemsize)

    # Zero-pad features (does not change the Gram matrix or norms).
    x_pad = jnp.pad(inputs, ((0, n_pad - n), (0, dp - d)))
    x_gram = x_pad.astype(gram_dtype)

    # Labels: padded entries get -1, which never matches a real label.
    lbl = jnp.pad(targets.astype(jnp.int32), (0, n_pad - n), constant_values=-1)
    lbl_row = lbl.reshape(n_pad, 1)
    lbl_col = lbl.reshape(1, n_pad)

    # Squared norms in f32 without materializing a full f32 copy of x_pad.
    sq = jnp.einsum("nd,nd->n", x_pad, x_pad, preferred_element_type=jnp.float32)
    sq_row = sq.reshape(n_pad, 1)
    # Pre-halved column norms, lane-oriented; padded columns get +inf so they can never
    # win the hard-negative min.
    col_valid = jnp.arange(n_pad) < n
    half_sq_col = jnp.where(col_valid, 0.5 * sq, jnp.inf).reshape(1, n_pad)

    grid = (n_pad // tm, n_pad // tn)

    # Explicit VMEM limit: double-buffered feature tiles + small operands + headroom.
    tile_bytes = 2 * (tm + tn) * dp * itemsize
    vmem_limit = int(min(48 << 20, max(tile_bytes + (6 << 20), 16 << 20)))

    per_row = pl.pallas_call(
        _make_triplet_kernel(float(margin)),
        out_shape=jax.ShapeDtypeStruct((n_pad, 1), jnp.float32),
        grid_spec=pltpu.PrefetchScalarGridSpec(
            num_scalar_prefetch=0,
            grid=grid,
            in_specs=[
                pl.BlockSpec((tm, dp), lambda i, j: (i, 0)),   # row feature tile
                pl.BlockSpec((tn, dp), lambda i, j: (j, 0)),   # col feature tile
                pl.BlockSpec((tm, 1), lambda i, j: (i, 0)),    # row labels
                pl.BlockSpec((1, tn), lambda i, j: (0, j)),    # col labels (lane-oriented)
                pl.BlockSpec((1, tn), lambda i, j: (0, j)),    # 0.5*col sq norms (+inf pad)
                pl.BlockSpec((tm, 1), lambda i, j: (i, 0)),    # row sq norms
            ],
            out_specs=pl.BlockSpec((tm, 1), lambda i, j: (i, 0)),
            scratch_shapes=[
                pltpu.VMEM((tm, 1), jnp.float32),              # running max h (positives)
                pltpu.VMEM((tm, 1), jnp.float32),              # running min h (negatives)
            ],
        ),
        compiler_params=pltpu.CompilerParams(
            dimension_semantics=("parallel", "arbitrary"),
            vmem_limit_bytes=vmem_limit),
        cost_estimate=pl.CostEstimate(
            flops=2 * n_pad * n_pad * dp,
            transcendentals=2 * n_pad,
            bytes_accessed=(1 + grid[0]) * n_pad * dp * itemsize + 6 * n_pad * 4),
    )(x_gram, x_gram, lbl_row, lbl_col, half_sq_col, sq_row)

    # Mean over the real (unpadded) rows done in the wrapper.
    return jnp.mean(per_row[:n, 0])


def _reference(inputs, targets, margin=0.5):
    """Pure-JAX reference mirroring the PyTorch forward."""
    x = inputs.astype(jnp.float32)
    sq = jnp.sum(x * x, axis=1, keepdims=True)
    d2 = sq + sq.T - 2.0 * (x @ x.T)
    dist = jnp.sqrt(jnp.maximum(d2, 1e-12))
    same = targets[:, None] == targets[None, :]
    dist_ap = jnp.max(jnp.where(same, dist, -jnp.inf), axis=1)
    dist_an = jnp.min(jnp.where(same, jnp.inf, dist), axis=1)
    return jnp.mean(jnp.maximum(dist_ap - dist_an + margin, 0.0))


if __name__ == "__main__":
    key = jax.random.PRNGKey(0)
    n, feat_dim = 8, 32
    inputs = jax.random.normal(key, (n, feat_dim), dtype=jnp.float32)
    targets = jnp.array([0, 0, 1, 1, 2, 2, 3, 3], dtype=jnp.int32)

    loss = batch_hard_triplet_loss(inputs, targets, margin=0.5)
    loss = jax.block_until_ready(loss)

    ref = _reference(inputs, targets, margin=0.5)
    assert jnp.allclose(loss, ref, atol=1e-5, rtol=1e-5), (loss, ref)
    print("KERNEL_OK")
</pallas_src>

<mosaic_0001>
module attributes {stable_mosaic.version = 11 : i64} {
  func.func @kernel(%arg0: i32, %arg1: i32, %arg2: memref<128x128xf32, #tpu.memory_space<vmem>>, %arg3: memref<128x128xf32, #tpu.memory_space<vmem>>, %arg4: memref<128x1xi32, #tpu.memory_space<vmem>>, %arg5: memref<1x128xi32, #tpu.memory_space<vmem>>, %arg6: memref<1x128xf32, #tpu.memory_space<vmem>>, %arg7: memref<128x1xf32, #tpu.memory_space<vmem>>, %arg8: memref<128x1xf32, #tpu.memory_space<vmem>>, %arg9: memref<128x1xf32, #tpu.memory_space<vmem>>, %arg10: memref<128x1xf32, #tpu.memory_space<vmem>>) attributes {dimension_semantics = [#tpu.dimension_semantics<parallel>, #tpu.dimension_semantics<arbitrary>], iteration_bounds = array<i64: 1, 1>, scalar_prefetch = 0 : i64, scratch_operands = 2 : i64, tpu.core_type = #tpu.core_type<tc>, window_params = [{transform_indices = @transform_0, window_bounds = array<i64: 128, 128>}, {transform_indices = @transform_1, window_bounds = array<i64: 128, 128>}, {transform_indices = @transform_2, window_bounds = array<i64: 128, 1>}, {transform_indices = @transform_3, window_bounds = array<i64: 1, 128>}, {transform_indices = @transform_4, window_bounds = array<i64: 1, 128>}, {transform_indices = @transform_5, window_bounds = array<i64: 128, 1>}, {transform_indices = @transform_6, window_bounds = array<i64: 128, 1>}]} {
    %c0_i32 = arith.constant 0 : i32
    %0 = arith.cmpi eq, %arg1, %c0_i32 : i32
    %1 = arith.extui %0 : i1 to i32
    %c0_i32_0 = arith.constant 0 : i32
    %2 = arith.cmpi ne, %1, %c0_i32_0 : i32
    scf.if %2 {
      %cst_24 = arith.constant 0xFF800000 : f32
      %31 = vector.broadcast %cst_24 : f32 to vector<128x1xf32>
      %c0_25 = arith.constant 0 : index
      %c0_26 = arith.constant 0 : index
      %32 = vector.load %arg9[%c0_25, %c0_26] : memref<128x1xf32, #tpu.memory_space<vmem>>, vector<128x1xf32>
      tpu.vector_store %arg9[%c0_25, %c0_26], %31 {strides = array<i32>} : memref<128x1xf32, #tpu.memory_space<vmem>>, vector<128x1xf32>,
      %cst_27 = arith.constant 0x7F800000 : f32
      %33 = vector.broadcast %cst_27 : f32 to vector<128x1xf32>
      %c0_28 = arith.constant 0 : index
      %c0_29 = arith.constant 0 : index
      %34 = vector.load %arg10[%c0_28, %c0_29] : memref<128x1xf32, #tpu.memory_space<vmem>>, vector<128x1xf32>
      tpu.vector_store %arg10[%c0_28, %c0_29], %33 {strides = array<i32>} : memref<128x1xf32, #tpu.memory_space<vmem>>, vector<128x1xf32>,
    } else {
    }
    %c0 = arith.constant 0 : index
    %c0_1 = arith.constant 0 : index
    %3 = vector.load %arg2[%c0, %c0_1] : memref<128x128xf32, #tpu.memory_space<vmem>>, vector<128x128xf32>
    %c0_2 = arith.constant 0 : index
    %c0_3 = arith.constant 0 : index
    %4 = vector.load %arg3[%c0_2, %c0_3] : memref<128x128xf32, #tpu.memory_space<vmem>>, vector<128x128xf32>
    %cst = arith.constant dense<0.000000e+00> : vector<128x128xf32>
    %5 = tpu.matmul %3, %4, %cst {dimension_numbers = #tpu.dot_dimension_numbers<[1], [1], [0], [0], [0, 0, 1, 0], [], []>} : vector<128x128xf32>, vector<128x128xf32>, vector<128x128xf32> -> vector<128x128xf32>
    %c0_4 = arith.constant 0 : index
    %c0_5 = arith.constant 0 : index
    %6 = vector.load %arg6[%c0_4, %c0_5] : memref<1x128xf32, #tpu.memory_space<vmem>>, vector<1x128xf32>
    %7 = vector.broadcast %6 : vector<1x128xf32> to vector<128x128xf32>
    %8 = arith.subf %7, %5 : vector<128x128xf32>
    %c0_6 = arith.constant 0 : index
    %c0_7 = arith.constant 0 : index
    %9 = vector.load %arg4[%c0_6, %c0_7] : memref<128x1xi32, #tpu.memory_space<vmem>>, vector<128x1xi32>
    %c0_8 = arith.constant 0 : index
    %c0_9 = arith.constant 0 : index
    %10 = vector.load %arg5[%c0_8, %c0_9] : memref<1x128xi32, #tpu.memory_space<vmem>>, vector<1x128xi32>
    %11 = vector.broadcast %9 : vector<128x1xi32> to vector<128x128xi32>
    %12 = vector.broadcast %10 : vector<1x128xi32> to vector<128x128xi32>
    %13 = arith.cmpi eq, %11, %12 : vector<128x128xi32>
    %cst_10 = arith.constant 0xFF800000 : f32
    %14 = vector.broadcast %cst_10 : f32 to vector<128x128xf32>
    %15 = arith.select %13, %8, %14 : vector<128x128xi1>, vector<128x128xf32>
    %cst_11 = arith.constant 0x7F800000 : f32
    %16 = vector.broadcast %cst_11 : f32 to vector<128x128xf32>
    %17 = arith.select %13, %16, %8 : vector<128x128xi1>, vector<128x128xf32>
    %c0_12 = arith.constant 0 : index
    %c0_13 = arith.constant 0 : index
    %18 = vector.load %arg9[%c0_12, %c0_13] : memref<128x1xf32, #tpu.memory_space<vmem>>, vector<128x1xf32>
    %cst_14 = arith.constant dense<0xFF800000> : vector<128xf32>
    %19 = vector.multi_reduction <maximumf>, %15, %cst_14 [1] : vector<128x128xf32> to vector<128xf32>
    %20 = vector.shape_cast %19 : vector<128xf32> to vector<128x1xf32>
    %21 = arith.maximumf %18, %20 : vector<128x1xf32>
    %c0_15 = arith.constant 0 : index
    %c0_16 = arith.constant 0 : index
    %22 = vector.load %arg9[%c0_15, %c0_16] : memref<128x1xf32, #tpu.memory_space<vmem>>, vector<128x1xf32>
    tpu.vector_store %arg9[%c0_15, %c0_16], %21 {strides = array<i32>} : memref<128x1xf32, #tpu.memory_space<vmem>>, vector<128x1xf32>,
    %c0_17 = arith.constant 0 : index
    %c0_18 = arith.constant 0 : index
    %23 = vector.load %arg10[%c0_17, %c0_18] : memref<128x1xf32, #tpu.memory_space<vmem>>, vector<128x1xf32>
    %cst_19 = arith.constant dense<0x7F800000> : vector<128xf32>
    %24 = vector.multi_reduction <minimumf>, %17, %cst_19 [1] : vector<128x128xf32> to vector<128xf32>
    %25 = vector.shape_cast %24 : vector<128xf32> to vector<128x1xf32>
    %26 = arith.minimumf %23, %25 : vector<128x1xf32>
    %c0_20 = arith.constant 0 : index
    %c0_21 = arith.constant 0 : index
    %27 = vector.load %arg10[%c0_20, %c0_21] : memref<128x1xf32, #tpu.memory_space<vmem>>, vector<128x1xf32>
    tpu.vector_store %arg10[%c0_20, %c0_21], %26 {strides = array<i32>} : memref<128x1xf32, #tpu.memory_space<vmem>>, vector<128x1xf32>,
    %c0_i32_22 = arith.constant 0 : i32
    %28 = arith.cmpi eq, %arg1, %c0_i32_22 : i32
    %29 = arith.extui %28 : i1 to i32
    %c0_i32_23 = arith.constant 0 : i32
    %30 = arith.cmpi ne, %29, %c0_i32_23 : i32
    scf.if %30 {
      %c0_24 = arith.constant 0 : index
      %c0_25 = arith.constant 0 : index
      %31 = vector.load %arg7[%c0_24, %c0_25] : memref<128x1xf32, #tpu.memory_space<vmem>>, vector<128x1xf32>
      %c0_26 = arith.constant 0 : index
      %c0_27 = arith.constant 0 : index
      %32 = vector.load %arg9[%c0_26, %c0_27] : memref<128x1xf32, #tpu.memory_space<vmem>>, vector<128x1xf32>
      %cst_28 = arith.constant 2.000000e+00 : f32
      %33 = vector.broadcast %cst_28 : f32 to vector<128x1xf32>
      %34 = arith.mulf %33, %32 : vector<128x1xf32>
      %35 = arith.addf %34, %31 : vector<128x1xf32>
      %cst_29 = arith.constant 9.99999996E-13 : f32
      %36 = vector.broadcast %cst_29 : f32 to vector<128x1xf32>
      %37 = arith.maximumf %35, %36 : vector<128x1xf32>
      %38 = math.sqrt %37 : vector<128x1xf32>
      %c0_30 = arith.constant 0 : index
      %c0_31 = arith.constant 0 : index
      %39 = vector.load %arg10[%c0_30, %c0_31] : memref<128x1xf32, #tpu.memory_space<vmem>>, vector<128x1xf32>
      %cst_32 = arith.constant 2.000000e+00 : f32
      %40 = vector.broadcast %cst_32 : f32 to vector<128x1xf32>
      %41 = arith.mulf %40, %39 : vector<128x1xf32>
      %42 = arith.addf %41, %31 : vector<128x1xf32>
      %cst_33 = arith.constant 9.99999996E-13 : f32
      %43 = vector.broadcast %cst_33 : f32 to vector<128x1xf32>
      %44 = arith.maximumf %42, %43 : vector<128x1xf32>
      %45 = math.sqrt %44 : vector<128x1xf32>
      %46 = arith.subf %38, %45 : vector<128x1xf32>
      %cst_34 = arith.constant 5.000000e-01 : f32
      %47 = vector.broadcast %cst_34 : f32 to vector<128x1xf32>
      %48 = arith.addf %46, %47 : vector<128x1xf32>
      %cst_35 = arith.constant 0.000000e+00 : f32
      %49 = vector.broadcast %cst_35 : f32 to vector<128x1xf32>
      %50 = arith.maximumf %48, %49 : vector<128x1xf32>
      %c0_36 = arith.constant 0 : index
      %c0_37 = arith.constant 0 : index
      %51 = vector.load %arg8[%c0_36, %c0_37] : memref<128x1xf32, #tpu.memory_space<vmem>>, vector<128x1xf32>
      tpu.vector_store %arg8[%c0_36, %c0_37], %50 {strides = array<i32>} : memref<128x1xf32, #tpu.memory_space<vmem>>, vector<128x1xf32>,
    } else {
    }
    return
  }
  func.func @transform_0(%arg0: i32, %arg1: i32) -> (i32, i32) {
    %c0_i32 = arith.constant 0 : i32
    %c0_i32_0 = arith.constant 0 : i32
    return %arg0, %c0_i32 : i32, i32
  }
  func.func @transform_1(%arg0: i32, %arg1: i32) -> (i32, i32) {
    %c0_i32 = arith.constant 0 : i32
    %c0_i32_0 = arith.constant 0 : i32
    return %arg1, %c0_i32 : i32, i32
  }
  func.func @transform_2(%arg0: i32, %arg1: i32) -> (i32, i32) {
    %c0_i32 = arith.constant 0 : i32
    %c0_i32_0 = arith.constant 0 : i32
    return %arg0, %c0_i32 : i32, i32
  }
  func.func @transform_3(%arg0: i32, %arg1: i32) -> (i32, i32) {
    %c0_i32 = arith.constant 0 : i32
    %c0_i32_0 = arith.constant 0 : i32
    return %c0_i32, %arg1 : i32, i32
  }
  func.func @transform_4(%arg0: i32, %arg1: i32) -> (i32, i32) {
    %c0_i32 = arith.constant 0 : i32
    %c0_i32_0 = arith.constant 0 : i32
    return %c0_i32, %arg1 : i32, i32
  }
  func.func @transform_5(%arg0: i32, %arg1: i32) -> (i32, i32) {
    %c0_i32 = arith.constant 0 : i32
    %c0_i32_0 = arith.constant 0 : i32
    return %arg0, %c0_i32 : i32, i32
  }
  func.func @transform_6(%arg0: i32, %arg1: i32) -> (i32, i32) {
    %c0_i32 = arith.constant 0 : i32
    %c0_i32_0 = arith.constant 0 : i32
    return %arg0, %c0_i32 : i32, i32
  }
}

</mosaic_0001>

<llo_original>
// kernel: batch_hard_triplet_loss.1
$region0: #{batch_hard_triplet_loss.1}
  #allocation0 [shape = 'u32[]', space=smem, size = 0x4, offset = 0x4, fixed_abs, tag = 'smem constant byte address 0x4 - core index']
  #allocation1 [shape = 'u32[144,128]{1,0:T(1,128)}', space=vmem, size = 0x12000, scoped, tag = 'internal scratch']
  #allocation2 [shape = 'f32[128,1]{1,0:T(8,128)}', space=vmem, size = 0x10000, scoped, tag = 'scratch operand']
  #allocation3 [shape = 'f32[128,1]{1,0:T(8,128)}', space=vmem, size = 0x10000, scoped, tag = 'scratch operand']
  %s0 = inlined_call_operand.vmem [shape: f32[128,128], index: 0, kind: input, shape index: {}, may-alias: {0,1}]
  %s1 = inlined_call_operand.vmem [shape: f32[128,128], index: 1, kind: input, shape index: {}, may-alias: {0,1}]
  %s2 = inlined_call_operand.vmem [shape: s32[128,1], index: 2, kind: input, shape index: {}]
  %s3 = inlined_call_operand.vmem [shape: s32[1,128], index: 3, kind: input, shape index: {}]
  %s4 = inlined_call_operand.vmem [shape: f32[1,128], index: 4, kind: input, shape index: {}]
  %s5 = inlined_call_operand.vmem [shape: f32[128,1], index: 5, kind: input, shape index: {}]
  %s6 = inlined_call_operand.vmem [shape: f32[128,1], index: 6, kind: output, shape index: {}]
  %s7 = sld [smem:[#allocation0]]
  $region42: #{batch_hard_triplet_loss.1} parent=0
    _
  %s9 = ssub.s32 1, %s7
  %s10 = scalar_select 0, %s9, %s7
  // Predicated region
  $region2: #{batch_hard_triplet_loss.1} parent=0 // pred_check
    _
  $region3: #{batch_hard_triplet_loss.1} parent=0 // pred_check_branch
    %12 = sbr.rel (0) target = $region5
  $region4: #{batch_hard_triplet_loss.1} parent=0 // pred_region
    _
  $region5: #{batch_hard_triplet_loss.1} parent=0 // pred_fallthru
    _
  // Predicated region
  $region6: #{batch_hard_triplet_loss.1} parent=0 // pred_check
    _
  $region7: #{batch_hard_triplet_loss.1} parent=0 // pred_check_branch
    %14 = sbr.rel (0) target = $region9
  $region8: #{batch_hard_triplet_loss.1} parent=0 // pred_region
    _
  $region9: #{batch_hard_triplet_loss.1} parent=0 // pred_fallthru
    _
  // Predicated region
  $region10: #{batch_hard_triplet_loss.1} parent=0 // pred_check
    _
  $region11: #{batch_hard_triplet_loss.1} parent=0 // pred_check_branch
    %16 = sbr.rel (0) target = $region13
  $region12: #{batch_hard_triplet_loss.1} parent=0 // pred_region
    _
  $region13: #{batch_hard_triplet_loss.1} parent=0 // pred_fallthru
    _
  // Predicated region
  $region14: #{batch_hard_triplet_loss.1} parent=0 // pred_check
    _
  $region15: #{batch_hard_triplet_loss.1} parent=0 // pred_check_branch
    %18 = sbr.rel (0) target = $region17
  $region16: #{batch_hard_triplet_loss.1} parent=0 // pred_region
    _
  $region17: #{batch_hard_triplet_loss.1} parent=0 // pred_fallthru
    _
  // Predicated region
  $region18: #{batch_hard_triplet_loss.1} parent=0 // pred_check
    _
  $region19: #{batch_hard_triplet_loss.1} parent=0 // pred_check_branch
    %20 = sbr.rel (0) target = $region21
  $region20: #{batch_hard_triplet_loss.1} parent=0 // pred_region
    _
  $region21: #{batch_hard_triplet_loss.1} parent=0 // pred_fallthru
    _
  // Predicated region
  $region22: #{batch_hard_triplet_loss.1} parent=0 // pred_check
    _
  $region23: #{batch_hard_triplet_loss.1} parent=0 // pred_check_branch
    %22 = sbr.rel (0) target = $region25
  $region24: #{batch_hard_triplet_loss.1} parent=0 // pred_region
    _
  $region25: #{batch_hard_triplet_loss.1} parent=0 // pred_fallthru
    _
  %p23 = scmp.eq.s32.totalorder 0, 0
  // Predicated region
  $region26: #{batch_hard_triplet_loss.1} parent=0 // pred_check
    %p24 = pneg %p23
  $region27: #{batch_hard_triplet_loss.1} parent=0 // pred_check_branch
    %26 = sbr.rel (%p24) target = $region29
  $region28: #{batch_hard_triplet_loss.1} parent=0 // pred_region
    %vm27 = vcmask 7168
    %28 = vst.msk [vmem:[#allocation2] sm:$0xff] %vm27, -inf
    %29 = vst.msk [vmem:[#allocation2 + $0x8] sm:$0xff] %vm27, -inf
    %30 = vst.msk [vmem:[#allocation2 + $0x10] sm:$0xff] %vm27, -inf
    %31 = vst.msk [vmem:[#allocation2 + $0x18] sm:$0xff] %vm27, -inf
    %32 = vst.msk [vmem:[#allocation2 + $0x20] sm:$0xff] %vm27, -inf
    %33 = vst.msk [vmem:[#allocation2 + $0x28] sm:$0xff] %vm27, -inf
    %34 = vst.msk [vmem:[#allocation2 + $0x30] sm:$0xff] %vm27, -inf
    %35 = vst.msk [vmem:[#allocation2 + $0x38] sm:$0xff] %vm27, -inf
    %36 = vst.msk [vmem:[#allocation2 + $0x40] sm:$0xff] %vm27, -inf
    %37 = vst.msk [vmem:[#allocation2 + $0x48] sm:$0xff] %vm27, -inf
    %38 = vst.msk [vmem:[#allocation2 + $0x50] sm:$0xff] %vm27, -inf
    %39 = vst.msk [vmem:[#allocation2 + $0x58] sm:$0xff] %vm27, -inf
    %40 = vst.msk [vmem:[#allocation2 + $0x60] sm:$0xff] %vm27, -inf
    %41 = vst.msk [vmem:[#allocation2 + $0x68] sm:$0xff] %vm27, -inf
    %42 = vst.msk [vmem:[#allocation2 + $0x70] sm:$0xff] %vm27, -inf
    %43 = vst.msk [vmem:[#allocation2 + $0x78] sm:$0xff] %vm27, -inf
    %44 = vst.msk [vmem:[#allocation3] sm:$0xff] %vm27, inf
    %45 = vst.msk [vmem:[#allocation3 + $0x8] sm:$0xff] %vm27, inf
    %46 = vst.msk [vmem:[#allocation3 + $0x10] sm:$0xff] %vm27, inf
    %47 = vst.msk [vmem:[#allocation3 + $0x18] sm:$0xff] %vm27, inf
    %48 = vst.msk [vmem:[#allocation3 + $0x20] sm:$0xff] %vm27, inf
    %49 = vst.msk [vmem:[#allocation3 + $0x28] sm:$0xff] %vm27, inf
    %50 = vst.msk [vmem:[#allocation3 + $0x30] sm:$0xff] %vm27, inf
    %51 = vst.msk [vmem:[#allocation3 + $0x38] sm:$0xff] %vm27, inf
    %52 = vst.msk [vmem:[#allocation3 + $0x40] sm:$0xff] %vm27, inf
    %53 = vst.msk [vmem:[#allocation3 + $0x48] sm:$0xff] %vm27, inf
    %54 = vst.msk [vmem:[#allocation3 + $0x50] sm:$0xff] %vm27, inf
    %55 = vst.msk [vmem:[#allocation3 + $0x58] sm:$0xff] %vm27, inf
    %56 = vst.msk [vmem:[#allocation3 + $0x60] sm:$0xff] %vm27, inf
    %57 = vst.msk [vmem:[#allocation3 + $0x68] sm:$0xff] %vm27, inf
    %58 = vst.msk [vmem:[#allocation3 + $0x70] sm:$0xff] %vm27, inf
    %59 = vst.msk [vmem:[#allocation3 + $0x78] sm:$0xff] %vm27, inf
  $region29: #{batch_hard_triplet_loss.1} parent=0 // pred_fallthru
    _
  %v60 = vld [vmem:[%s0] sm:$0xff]
  %v61 = vld [vmem:[%s0 + $0x8] sm:$0xff]
  %v62 = vld [vmem:[%s0 + $0x10] sm:$0xff]
  %v63 = vld [vmem:[%s0 + $0x18] sm:$0xff]
  %v64 = vld [vmem:[%s0 + $0x20] sm:$0xff]
  %v65 = vld [vmem:[%s0 + $0x28] sm:$0xff]
  %v66 = vld [vmem:[%s0 + $0x30] sm:$0xff]
  %v67 = vld [vmem:[%s0 + $0x38] sm:$0xff]
  %v68 = vld [vmem:[%s0 + $0x40] sm:$0xff]
  %v69 = vld [vmem:[%s0 + $0x48] sm:$0xff]
  %v70 = vld [vmem:[%s0 + $0x50] sm:$0xff]
  %v71 = vld [vmem:[%s0 + $0x58] sm:$0xff]
  %v72 = vld [vmem:[%s0 + $0x60] sm:$0xff]
  %v73 = vld [vmem:[%s0 + $0x68] sm:$0xff]
  %v74 = vld [vmem:[%s0 + $0x70] sm:$0xff]
  %v75 = vld [vmem:[%s0 + $0x78] sm:$0xff]
  %v76 = vld [vmem:[%s1] sm:$0xff]
  %v77 = vld [vmem:[%s1 + $0x8] sm:$0xff]
  %v78 = vld [vmem:[%s1 + $0x10] sm:$0xff]
  %v79 = vld [vmem:[%s1 + $0x18] sm:$0xff]
  %v80 = vld [vmem:[%s1 + $0x20] sm:$0xff]
  %v81 = vld [vmem:[%s1 + $0x28] sm:$0xff]
  %v82 = vld [vmem:[%s1 + $0x30] sm:$0xff]
  %v83 = vld [vmem:[%s1 + $0x38] sm:$0xff]
  %v84 = vld [vmem:[%s1 + $0x40] sm:$0xff]
  %v85 = vld [vmem:[%s1 + $0x48] sm:$0xff]
  %v86 = vld [vmem:[%s1 + $0x50] sm:$0xff]
  %v87 = vld [vmem:[%s1 + $0x58] sm:$0xff]
  %v88 = vld [vmem:[%s1 + $0x60] sm:$0xff]
  %v89 = vld [vmem:[%s1 + $0x68] sm:$0xff]
  %v90 = vld [vmem:[%s1 + $0x70] sm:$0xff]
  %v91 = vld [vmem:[%s1 + $0x78] sm:$0xff]
  %92 = vmatprep.subr.mxu0 0.0
  %93 = vmatpush1.xpose.msra.mxu0 %v76
  %94 = vmatprep.subr.mxu0 0.0
  %95 = vmatpush1.xpose.msra.mxu0 %v77
  %96 = vmatprep.subr.mxu0 0.0
  %97 = vmatpush1.xpose.msra.mxu0 %v78
  %98 = vmatprep.subr.mxu0 0.0
  %99 = vmatpush1.xpose.msra.mxu0 %v79
  %100 = vmatprep.subr.mxu0 0.0
  %101 = vmatpush1.xpose.msra.mxu0 %v80
  %102 = vmatprep.subr.mxu0 0.0
  %103 = vmatpush1.xpose.msra.mxu0 %v81
  %104 = vmatprep.subr.mxu0 0.0
  %105 = vmatpush1.xpose.msra.mxu0 %v82
  %106 = vmatprep.subr.mxu0 0.0
  %107 = vmatpush1.xpose.msra.mxu0 %v83
  %108 = vmatprep.subr.mxu0 0.0
  %109 = vmatpush1.xpose.msra.mxu0 %v84
  %110 = vmatprep.subr.mxu0 0.0
  %111 = vmatpush1.xpose.msra.mxu0 %v85
  %112 = vmatprep.subr.mxu0 0.0
  %113 = vmatpush1.xpose.msra.mxu0 %v86
  %114 = vmatprep.subr.mxu0 0.0
  %115 = vmatpush1.xpose.msra.mxu0 %v87
  %116 = vmatprep.subr.mxu0 0.0
  %117 = vmatpush1.xpose.msra.mxu0 %v88
  %118 = vmatprep.subr.mxu0 0.0
  %119 = vmatpush1.xpose.msra.mxu0 %v89
  %120 = vmatprep.subr.mxu0 0.0
  %121 = vmatpush1.xpose.msra.mxu0 %v90
  %122 = vmatprep.subr.mxu0 0.0
  %123 = vmatpush1.xpose.msra.mxu0 %v91
  %124 = vmatprep.subr.mxu0 0.0
  %125 = vmatpush1.xpose.msra.mxu0 0.0
  %126 = vmatprep.subr.mxu0 0.0
  %127 = vmatpush1.xpose.msra.mxu0 0.0
  %128 = vmatprep.subr.mxu0 0.0
  %129 = vmatpush1.xpose.msra.mxu0 0.0
  %130 = vmatprep.subr.mxu0 0.0
  %131 = vmatpush1.xpose.msra.mxu0 0.0
  %132 = vmatprep.subr.mxu0 0.0
  %133 = vmatpush1.xpose.msra.mxu0 0.0
  %134 = vmatprep.subr.mxu0 0.0
  %135 = vmatpush1.xpose.msra.mxu0 0.0
  %136 = vmatprep.subr.mxu0 0.0
  %137 = vmatpush1.xpose.msra.mxu0 0.0
  %138 = vmatprep.subr.mxu0 0.0
  %139 = vmatpush1.xpose.msra.mxu0 0.0
  %140 = vmatprep.subr.mxu0 0.0
  %141 = vmatpush1.xpose.msra.mxu0 0.0
  %142 = vmatprep.subr.mxu0 0.0
  %143 = vmatpush1.xpose.msra.mxu0 0.0
  %144 = vmatprep.subr.mxu0 0.0
  %145 = vmatpush1.xpose.msra.mxu0 0.0
  %146 = vmatprep.subr.mxu0 0.0
  %147 = vmatpush1.xpose.msra.mxu0 0.0
  %148 = vmatprep.subr.mxu0 0.0
  %149 = vmatpush1.xpose.msra.mxu0 0.0
  %150 = vmatprep.subr.mxu0 0.0
  %151 = vmatpush1.xpose.msra.mxu0 0.0
  %152 = vmatprep.subr.mxu0 0.0
  %153 = vmatpush1.xpose.msra.mxu0 0.0
  %154 = vmatprep.subr.mxu0 0.0
  %155 = vmatpush1.xpose.msra.mxu0 0.0
  %156 = vmatprep.mubr.f32.mxu0 0.0
  %157 = vmatmul.mubr.f32.gmra.mrb[0].mxu0 %v60
  %v158 = vpop.f32.mrb[0].mxu0
  %v159 = vadd.f32 0.0, %v158
  %v160 = vpop.f32.mrb[0].mxu0
  %161 = vmatprep.mubr.f32.mxu0 0.0
  %162 = vmatmul.mubr.f32.gmra.mrb[0].mxu0 %v61
  %v163 = vpop.f32.mrb[0].mxu0
  %v164 = vadd.f32 0.0, %v163
  %v165 = vpop.f32.mrb[0].mxu0
  %166 = vmatprep.mubr.f32.mxu0 0.0
  %167 = vmatmul.mubr.f32.gmra.mrb[0].mxu0 %v62
  %v168 = vpop.f32.mrb[0].mxu0
  %v169 = vadd.f32 0.0, %v168
  %v170 = vpop.f32.mrb[0].mxu0
  %171 = vmatprep.mubr.f32.mxu0 0.0
  %172 = vmatmul.mubr.f32.gmra.mrb[0].mxu0 %v63
  %v173 = vpop.f32.mrb[0].mxu0
  %v174 = vadd.f32 0.0, %v173
  %v175 = vpop.f32.mrb[0].mxu0
  %176 = vmatprep.mubr.f32.mxu0 0.0
  %177 = vmatmul.mubr.f32.gmra.mrb[0].mxu0 %v64
  %v178 = vpop.f32.mrb[0].mxu0
  %v179 = vadd.f32 0.0, %v178
  %v180 = vpop.f32.mrb[0].mxu0
  %181 = vmatprep.mubr.f32.mxu0 0.0
  %182 = vmatmul.mubr.f32.gmra.mrb[0].mxu0 %v65
  %v183 = vpop.f32.mrb[0].mxu0
  %v184 = vadd.f32 0.0, %v183
  %v185 = vpop.f32.mrb[0].mxu0
  %186 = vmatprep.mubr.f32.mxu0 0.0
  %187 = vmatmul.mubr.f32.gmra.mrb[0].mxu0 %v66
  %v188 = vpop.f32.mrb[0].mxu0
  %v189 = vadd.f32 0.0, %v188
  %v190 = vpop.f32.mrb[0].mxu0
  %191 = vmatprep.mubr.f32.mxu0 0.0
  %192 = vmatmul.mubr.f32.gmra.mrb[0].mxu0 %v67
  %v193 = vpop.f32.mrb[0].mxu0
  %v194 = vadd.f32 0.0, %v193
  %v195 = vpop.f32.mrb[0].mxu0
  %196 = vmatprep.mubr.f32.mxu0 0.0
  %197 = vmatmul.mubr.f32.gmra.mrb[0].mxu0 %v68
  %v198 = vpop.f32.mrb[0].mxu0
  %v199 = vadd.f32 0.0, %v198
  %v200 = vpop.f32.mrb[0].mxu0
  %201 = vmatprep.mubr.f32.mxu0 0.0
  %202 = vmatmul.mubr.f32.gmra.mrb[0].mxu0 %v69
  %v203 = vpop.f32.mrb[0].mxu0
  %v204 = vadd.f32 0.0, %v203
  %v205 = vpop.f32.mrb[0].mxu0
  %206 = vmatprep.mubr.f32.mxu0 0.0
  %207 = vmatmul.mubr.f32.gmra.mrb[0].mxu0 %v70
  %v208 = vpop.f32.mrb[0].mxu0
  %v209 = vadd.f32 0.0, %v208
  %v210 = vpop.f32.mrb[0].mxu0
  %211 = vmatprep.mubr.f32.mxu0 0.0
  %212 = vmatmul.mubr.f32.gmra.mrb[0].mxu0 %v71
  %v213 = vpop.f32.mrb[0].mxu0
  %v214 = vadd.f32 0.0, %v213
  %v215 = vpop.f32.mrb[0].mxu0
  %216 = vmatprep.mubr.f32.mxu0 0.0
  %217 = vmatmul.mubr.f32.gmra.mrb[0].mxu0 %v72
  %v218 = vpop.f32.mrb[0].mxu0
  %v219 = vadd.f32 0.0, %v218
  %v220 = vpop.f32.mrb[0].mxu0
  %221 = vmatprep.mubr.f32.mxu0 0.0
  %222 = vmatmul.mubr.f32.gmra.mrb[0].mxu0 %v73
  %v223 = vpop.f32.mrb[0].mxu0
  %v224 = vadd.f32 0.0, %v223
  %v225 = vpop.f32.mrb[0].mxu0
  %226 = vmatprep.mubr.f32.mxu0 0.0
  %227 = vmatmul.mubr.f32.gmra.mrb[0].mxu0 %v74
  %v228 = vpop.f32.mrb[0].mxu0
  %v229 = vadd.f32 0.0, %v228
  %v230 = vpop.f32.mrb[0].mxu0
  %231 = vmatprep.mubr.f32.mxu0 0.0
  %232 = vmatmul.mubr.f32.gmra.mrb[0].mxu0 %v75
  %v233 = vpop.f32.mrb[0].mxu0
  %v234 = vadd.f32 0.0, %v233
  %v235 = vpop.f32.mrb[0].mxu0
  %236 = vdwg.mxu0
  %v237 = vld [vmem:[%s4] sm:$0x1]
  %v239 = vlaneseq
  %v240 = vshrl.u32 %v239, 7
  %v241 = vsub.s32 0, %v240
  %v242 = vrot.slane %v237, %v241
  %v244 = vsub.f32 %v242, %v159
  %v245 = vsub.f32 %v242, %v164
  %v246 = vsub.f32 %v242, %v169
  %v247 = vsub.f32 %v242, %v174
  %v248 = vsub.f32 %v242, %v179
  %v249 = vsub.f32 %v242, %v184
  %v250 = vsub.f32 %v242, %v189
  %v251 = vsub.f32 %v242, %v194
  %v252 = vsub.f32 %v242, %v199
  %v253 = vsub.f32 %v242, %v204
  %v254 = vsub.f32 %v242, %v209
  %v255 = vsub.f32 %v242, %v214
  %v256 = vsub.f32 %v242, %v219
  %v257 = vsub.f32 %v242, %v224
  %v258 = vsub.f32 %v242, %v229
  %v259 = vsub.f32 %v242, %v234
  %v260 = vld [vmem:[%s2] sm:$0xff]
  %v261 = vld [vmem:[%s2 + $0x8] sm:$0xff]
  %v262 = vld [vmem:[%s2 + $0x10] sm:$0xff]
  %v263 = vld [vmem:[%s2 + $0x18] sm:$0xff]
  %v264 = vld [vmem:[%s2 + $0x20] sm:$0xff]
  %v265 = vld [vmem:[%s2 + $0x28] sm:$0xff]
  %v266 = vld [vmem:[%s2 + $0x30] sm:$0xff]
  %v267 = vld [vmem:[%s2 + $0x38] sm:$0xff]
  %v268 = vld [vmem:[%s2 + $0x40] sm:$0xff]
  %v269 = vld [vmem:[%s2 + $0x48] sm:$0xff]
  %v270 = vld [vmem:[%s2 + $0x50] sm:$0xff]
  %v271 = vld [vmem:[%s2 + $0x58] sm:$0xff]
  %v272 = vld [vmem:[%s2 + $0x60] sm:$0xff]
  %v273 = vld [vmem:[%s2 + $0x68] sm:$0xff]
  %v274 = vld [vmem:[%s2 + $0x70] sm:$0xff]
  %v275 = vld [vmem:[%s2 + $0x78] sm:$0xff]
  %v276 = vld [vmem:[%s3] sm:$0x1]
  %277 = vset.pattern.permute.xlu0 0
  %278 = vperm.xlu0 %277, %v260
  %v279 = vpop.permute.xlu0 %278
  %280 = vset.pattern.permute.xlu0 0
  %281 = vperm.xlu0 %280, %v261
  %v282 = vpop.permute.xlu0 %281
  %283 = vset.pattern.permute.xlu0 0
  %284 = vperm.xlu0 %283, %v262
  %v285 = vpop.permute.xlu0 %284
  %286 = vset.pattern.permute.xlu0 0
  %287 = vperm.xlu0 %286, %v263
  %v288 = vpop.permute.xlu0 %287
  %289 = vset.pattern.permute.xlu0 0
  %290 = vperm.xlu0 %289, %v264
  %v291 = vpop.permute.xlu0 %290
  %292 = vset.pattern.permute.xlu0 0
  %293 = vperm.xlu0 %292, %v265
  %v294 = vpop.permute.xlu0 %293
  %295 = vset.pattern.permute.xlu0 0
  %296 = vperm.xlu0 %295, %v266
  %v297 = vpop.permute.xlu0 %296
  %298 = vset.pattern.permute.xlu0 0
  %299 = vperm.xlu0 %298, %v267
  %v300 = vpop.permute.xlu0 %299
  %301 = vset.pattern.permute.xlu0 0
  %302 = vperm.xlu0 %301, %v268
  %v303 = vpop.permute.xlu0 %302
  %304 = vset.pattern.permute.xlu0 0
  %305 = vperm.xlu0 %304, %v269
  %v306 = vpop.permute.xlu0 %305
  %307 = vset.pattern.permute.xlu0 0
  %308 = vperm.xlu0 %307, %v270
  %v309 = vpop.permute.xlu0 %308
  %310 = vset.pattern.permute.xlu0 0
  %311 = vperm.xlu0 %310, %v271
  %v312 = vpop.permute.xlu0 %311
  %313 = vset.pattern.permute.xlu0 0
  %314 = vperm.xlu0 %313, %v272
  %v315 = vpop.permute.xlu0 %314
  %316 = vset.pattern.permute.xlu0 0
  %317 = vperm.xlu0 %316, %v273
  %v318 = vpop.permute.xlu0 %317
  %319 = vset.pattern.permute.xlu0 0
  %320 = vperm.xlu0 %319, %v274
  %v321 = vpop.permute.xlu0 %320
  %322 = vset.pattern.permute.xlu0 0
  %323 = vperm.xlu0 %322, %v275
  %v324 = vpop.permute.xlu0 %323
  %v325 = vlaneseq
  %v326 = vshrl.u32 %v325, 7
  %v327 = vsub.s32 0, %v326
  %v328 = vrot.slane %v276, %v327
  %vm329 = vcmp.eq.s32.totalorder %v279, %v328
  %vm330 = vcmp.eq.s32.totalorder %v282, %v328
  %vm331 = vcmp.eq.s32.totalorder %v285, %v328
  %vm332 = vcmp.eq.s32.totalorder %v288, %v328
  %vm333 = vcmp.eq.s32.totalorder %v291, %v328
  %vm334 = vcmp.eq.s32.totalorder %v294, %v328
  %vm335 = vcmp.eq.s32.totalorder %v297, %v328
  %vm336 = vcmp.eq.s32.totalorder %v300, %v328
  %vm337 = vcmp.eq.s32.totalorder %v303, %v328
  %vm338 = vcmp.eq.s32.totalorder %v306, %v328
  %vm339 = vcmp.eq.s32.totalorder %v309, %v328
  %vm340 = vcmp.eq.s32.totalorder %v312, %v328
  %vm341 = vcmp.eq.s32.totalorder %v315, %v328
  %vm342 = vcmp.eq.s32.totalorder %v318, %v328
  %vm343 = vcmp.eq.s32.totalorder %v321, %v328
  %vm344 = vcmp.eq.s32.totalorder %v324, %v328
  %v345 = vsel %vm329, %v244, -inf
  %v346 = vsel %vm330, %v245, -inf
  %v347 = vsel %vm331, %v246, -inf
  %v348 = vsel %vm332, %v247, -inf
  %v349 = vsel %vm333, %v248, -inf
  %v350 = vsel %vm334, %v249, -inf
  %v351 = vsel %vm335, %v250, -inf
  %v352 = vsel %vm336, %v251, -inf
  %v353 = vsel %vm337, %v252, -inf
  %v354 = vsel %vm338, %v253, -inf
  %v355 = vsel %vm339, %v254, -inf
  %v356 = vsel %vm340, %v255, -inf
  %v357 = vsel %vm341, %v256, -inf
  %v358 = vsel %vm342, %v257, -inf
  %v359 = vsel %vm343, %v258, -inf
  %v360 = vsel %vm344, %v259, -inf
  %v361 = vsel %vm329, inf, %v244
  %v362 = vsel %vm330, inf, %v245
  %v363 = vsel %vm331, inf, %v246
  %v364 = vsel %vm332, inf, %v247
  %v365 = vsel %vm333, inf, %v248
  %v366 = vsel %vm334, inf, %v249
  %v367 = vsel %vm335, inf, %v250
  %v368 = vsel %vm336, inf, %v251
  %v369 = vsel %vm337, inf, %v252
  %v370 = vsel %vm338, inf, %v253
  %v371 = vsel %vm339, inf, %v254
  %v372 = vsel %vm340, inf, %v255
  %v373 = vsel %vm341, inf, %v256
  %v374 = vsel %vm342, inf, %v257
  %v375 = vsel %vm343, inf, %v258
  %v376 = vsel %vm344, inf, %v259
  %v377 = vld [vmem:[#allocation2] sm:$0xff]
  %v378 = vld [vmem:[#allocation2 + $0x8] sm:$0xff]
  %v379 = vld [vmem:[#allocation2 + $0x10] sm:$0xff]
  %v380 = vld [vmem:[#allocation2 + $0x18] sm:$0xff]
  %v381 = vld [vmem:[#allocation2 + $0x20] sm:$0xff]
  %v382 = vld [vmem:[#allocation2 + $0x28] sm:$0xff]
  %v383 = vld [vmem:[#allocation2 + $0x30] sm:$0xff]
  %v384 = vld [vmem:[#allocation2 + $0x38] sm:$0xff]
  %v385 = vld [vmem:[#allocation2 + $0x40] sm:$0xff]
  %v386 = vld [vmem:[#allocation2 + $0x48] sm:$0xff]
  %v387 = vld [vmem:[#allocation2 + $0x50] sm:$0xff]
  %v388 = vld [vmem:[#allocation2 + $0x58] sm:$0xff]
  %v389 = vld [vmem:[#allocation2 + $0x60] sm:$0xff]
  %v390 = vld [vmem:[#allocation2 + $0x68] sm:$0xff]
  %v391 = vld [vmem:[#allocation2 + $0x70] sm:$0xff]
  %v392 = vld [vmem:[#allocation2 + $0x78] sm:$0xff]
  %393 = vmax.xlane.f32.xlu0 %v345
  %v394 = vpop.xlane.xlu0 %393
  %395 = vmax.xlane.f32.xlu0 %v346
  %v396 = vpop.xlane.xlu0 %395
  %397 = vmax.xlane.f32.xlu0 %v347
  %v398 = vpop.xlane.xlu0 %397
  %399 = vmax.xlane.f32.xlu0 %v348
  %v400 = vpop.xlane.xlu0 %399
  %401 = vmax.xlane.f32.xlu0 %v349
  %v402 = vpop.xlane.xlu0 %401
  %403 = vmax.xlane.f32.xlu0 %v350
  %v404 = vpop.xlane.xlu0 %403
  %405 = vmax.xlane.f32.xlu0 %v351
  %v406 = vpop.xlane.xlu0 %405
  %407 = vmax.xlane.f32.xlu0 %v352
  %v408 = vpop.xlane.xlu0 %407
  %409 = vmax.xlane.f32.xlu0 %v353
  %v410 = vpop.xlane.xlu0 %409
  %411 = vmax.xlane.f32.xlu0 %v354
  %v412 = vpop.xlane.xlu0 %411
  %413 = vmax.xlane.f32.xlu0 %v355
  %v414 = vpop.xlane.xlu0 %413
  %415 = vmax.xlane.f32.xlu0 %v356
  %v416 = vpop.xlane.xlu0 %415
  %417 = vmax.xlane.f32.xlu0 %v357
  %v418 = vpop.xlane.xlu0 %417
  %419 = vmax.xlane.f32.xlu0 %v358
  %v420 = vpop.xlane.xlu0 %419
  %421 = vmax.xlane.f32.xlu0 %v359
  %v422 = vpop.xlane.xlu0 %421
  %423 = vmax.xlane.f32.xlu0 %v360
  %v424 = vpop.xlane.xlu0 %423
  %v425 = vmax.f32 %v377, %v394
  %v426 = vmax.f32 %v378, %v396
  %v427 = vmax.f32 %v379, %v398
  %v428 = vmax.f32 %v380, %v400
  %v429 = vmax.f32 %v381, %v402
  %v430 = vmax.f32 %v382, %v404
  %v431 = vmax.f32 %v383, %v406
  %v432 = vmax.f32 %v384, %v408
  %v433 = vmax.f32 %v385, %v410
  %v434 = vmax.f32 %v386, %v412
  %v435 = vmax.f32 %v387, %v414
  %v436 = vmax.f32 %v388, %v416
  %v437 = vmax.f32 %v389, %v418
  %v438 = vmax.f32 %v390, %v420
  %v439 = vmax.f32 %v391, %v422
  %v440 = vmax.f32 %v392, %v424
  %vm441 = vcmask 7168
  %442 = vst.msk [vmem:[#allocation2] sm:$0xff] %vm441, %v425
  %443 = vst.msk [vmem:[#allocation2 + $0x8] sm:$0xff] %vm441, %v426
  %444 = vst.msk [vmem:[#allocation2 + $0x10] sm:$0xff] %vm441, %v427
  %445 = vst.msk [vmem:[#allocation2 + $0x18] sm:$0xff] %vm441, %v428
  %446 = vst.msk [vmem:[#allocation2 + $0x20] sm:$0xff] %vm441, %v429
  %447 = vst.msk [vmem:[#allocation2 + $0x28] sm:$0xff] %vm441, %v430
  %448 = vst.msk [vmem:[#allocation2 + $0x30] sm:$0xff] %vm441, %v431
  %449 = vst.msk [vmem:[#allocation2 + $0x38] sm:$0xff] %vm441, %v432
  %450 = vst.msk [vmem:[#allocation2 + $0x40] sm:$0xff] %vm441, %v433
  %451 = vst.msk [vmem:[#allocation2 + $0x48] sm:$0xff] %vm441, %v434
  %452 = vst.msk [vmem:[#allocation2 + $0x50] sm:$0xff] %vm441, %v435
  %453 = vst.msk [vmem:[#allocation2 + $0x58] sm:$0xff] %vm441, %v436
  %454 = vst.msk [vmem:[#allocation2 + $0x60] sm:$0xff] %vm441, %v437
  %455 = vst.msk [vmem:[#allocation2 + $0x68] sm:$0xff] %vm441, %v438
  %456 = vst.msk [vmem:[#allocation2 + $0x70] sm:$0xff] %vm441, %v439
  %457 = vst.msk [vmem:[#allocation2 + $0x78] sm:$0xff] %vm441, %v440
  %v458 = vld [vmem:[#allocation3] sm:$0xff]
  %v459 = vld [vmem:[#allocation3 + $0x8] sm:$0xff]
  %v460 = vld [vmem:[#allocation3 + $0x10] sm:$0xff]
  %v461 = vld [vmem:[#allocation3 + $0x18] sm:$0xff]
  %v462 = vld [vmem:[#allocation3 + $0x20] sm:$0xff]
  %v463 = vld [vmem:[#allocation3 + $0x28] sm:$0xff]
  %v464 = vld [vmem:[#allocation3 + $0x30] sm:$0xff]
  %v465 = vld [vmem:[#allocation3 + $0x38] sm:$0xff]
  %v466 = vld [vmem:[#allocation3 + $0x40] sm:$0xff]
  %v467 = vld [vmem:[#allocation3 + $0x48] sm:$0xff]
  %v468 = vld [vmem:[#allocation3 + $0x50] sm:$0xff]
  %v469 = vld [vmem:[#allocation3 + $0x58] sm:$0xff]
  %v470 = vld [vmem:[#allocation3 + $0x60] sm:$0xff]
  %v471 = vld [vmem:[#allocation3 + $0x68] sm:$0xff]
  %v472 = vld [vmem:[#allocation3 + $0x70] sm:$0xff]
  %v473 = vld [vmem:[#allocation3 + $0x78] sm:$0xff]
  %474 = vmin.xlane.f32.xlu0 %v361
  %v475 = vpop.xlane.xlu0 %474
  %476 = vmin.xlane.f32.xlu0 %v362
  %v477 = vpop.xlane.xlu0 %476
  %478 = vmin.xlane.f32.xlu0 %v363
  %v479 = vpop.xlane.xlu0 %478
  %480 = vmin.xlane.f32.xlu0 %v364
  %v481 = vpop.xlane.xlu0 %480
  %482 = vmin.xlane.f32.xlu0 %v365
  %v483 = vpop.xlane.xlu0 %482
  %484 = vmin.xlane.f32.xlu0 %v366
  %v485 = vpop.xlane.xlu0 %484
  %486 = vmin.xlane.f32.xlu0 %v367
  %v487 = vpop.xlane.xlu0 %486
  %488 = vmin.xlane.f32.xlu0 %v368
  %v489 = vpop.xlane.xlu0 %488
  %490 = vmin.xlane.f32.xlu0 %v369
  %v491 = vpop.xlane.xlu0 %490
  %492 = vmin.xlane.f32.xlu0 %v370
  %v493 = vpop.xlane.xlu0 %492
  %494 = vmin.xlane.f32.xlu0 %v371
  %v495 = vpop.xlane.xlu0 %494
  %496 = vmin.xlane.f32.xlu0 %v372
  %v497 = vpop.xlane.xlu0 %496
  %498 = vmin.xlane.f32.xlu0 %v373
  %v499 = vpop.xlane.xlu0 %498
  %500 = vmin.xlane.f32.xlu0 %v374
  %v501 = vpop.xlane.xlu0 %500
  %502 = vmin.xlane.f32.xlu0 %v375
  %v503 = vpop.xlane.xlu0 %502
  %504 = vmin.xlane.f32.xlu0 %v376
  %v505 = vpop.xlane.xlu0 %504
  %v506 = vmin.f32 %v458, %v475
  %v507 = vmin.f32 %v459, %v477
  %v508 = vmin.f32 %v460, %v479
  %v509 = vmin.f32 %v461, %v481
  %v510 = vmin.f32 %v462, %v483
  %v511 = vmin.f32 %v463, %v485
  %v512 = vmin.f32 %v464, %v487
  %v513 = vmin.f32 %v465, %v489
  %v514 = vmin.f32 %v466, %v491
  %v515 = vmin.f32 %v467, %v493
  %v516 = vmin.f32 %v468, %v495
  %v517 = vmin.f32 %v469, %v497
  %v518 = vmin.f32 %v470, %v499
  %v519 = vmin.f32 %v471, %v501
  %v520 = vmin.f32 %v472, %v503
  %v521 = vmin.f32 %v473, %v505
  %522 = vst.msk [vmem:[#allocation3] sm:$0xff] %vm441, %v506
  %523 = vst.msk [vmem:[#allocation3 + $0x8] sm:$0xff] %vm441, %v507
  %524 = vst.msk [vmem:[#allocation3 + $0x10] sm:$0xff] %vm441, %v508
  %525 = vst.msk [vmem:[#allocation3 + $0x18] sm:$0xff] %vm441, %v509
  %526 = vst.msk [vmem:[#allocation3 + $0x20] sm:$0xff] %vm441, %v510
  %527 = vst.msk [vmem:[#allocation3 + $0x28] sm:$0xff] %vm441, %v511
  %528 = vst.msk [vmem:[#allocation3 + $0x30] sm:$0xff] %vm441, %v512
  %529 = vst.msk [vmem:[#allocation3 + $0x38] sm:$0xff] %vm441, %v513
  %530 = vst.msk [vmem:[#allocation3 + $0x40] sm:$0xff] %vm441, %v514
  %531 = vst.msk [vmem:[#allocation3 + $0x48] sm:$0xff] %vm441, %v515
  %532 = vst.msk [vmem:[#allocation3 + $0x50] sm:$0xff] %vm441, %v516
  %533 = vst.msk [vmem:[#allocation3 + $0x58] sm:$0xff] %vm441, %v517
  %534 = vst.msk [vmem:[#allocation3 + $0x60] sm:$0xff] %vm441, %v518
  %535 = vst.msk [vmem:[#allocation3 + $0x68] sm:$0xff] %vm441, %v519
  %536 = vst.msk [vmem:[#allocation3 + $0x70] sm:$0xff] %vm441, %v520
  %537 = vst.msk [vmem:[#allocation3 + $0x78] sm:$0xff] %vm441, %v521
  // Predicated region
  $region30: #{batch_hard_triplet_loss.1} parent=0 // pred_check
    %p538 = pneg %p23
  $region31: #{batch_hard_triplet_loss.1} parent=0 // pred_check_branch
    %540 = sbr.rel (%p538) target = $region33
  $region32: #{batch_hard_triplet_loss.1} parent=0 // pred_region
    %v541 = vld [vmem:[%s5] sm:$0xff]
    %v542 = vld [vmem:[%s5 + $0x8] sm:$0xff]
    %v543 = vld [vmem:[%s5 + $0x10] sm:$0xff]
    %v544 = vld [vmem:[%s5 + $0x18] sm:$0xff]
    %v545 = vld [vmem:[%s5 + $0x20] sm:$0xff]
    %v546 = vld [vmem:[%s5 + $0x28] sm:$0xff]
    %v547 = vld [vmem:[%s5 + $0x30] sm:$0xff]
    %v548 = vld [vmem:[%s5 + $0x38] sm:$0xff]
    %v549 = vld [vmem:[%s5 + $0x40] sm:$0xff]
    %v550 = vld [vmem:[%s5 + $0x48] sm:$0xff]
    %v551 = vld [vmem:[%s5 + $0x50] sm:$0xff]
    %v552 = vld [vmem:[%s5 + $0x58] sm:$0xff]
    %v553 = vld [vmem:[%s5 + $0x60] sm:$0xff]
    %v554 = vld [vmem:[%s5 + $0x68] sm:$0xff]
    %v555 = vld [vmem:[%s5 + $0x70] sm:$0xff]
    %v556 = vld [vmem:[%s5 + $0x78] sm:$0xff]
    %v557 = vld [vmem:[#allocation2] sm:$0xff]
    %v558 = vld [vmem:[#allocation2 + $0x8] sm:$0xff]
    %v559 = vld [vmem:[#allocation2 + $0x10] sm:$0xff]
    %v560 = vld [vmem:[#allocation2 + $0x18] sm:$0xff]
    %v561 = vld [vmem:[#allocation2 + $0x20] sm:$0xff]
    %v562 = vld [vmem:[#allocation2 + $0x28] sm:$0xff]
    %v563 = vld [vmem:[#allocation2 + $0x30] sm:$0xff]
    %v564 = vld [vmem:[#allocation2 + $0x38] sm:$0xff]
    %v565 = vld [vmem:[#allocation2 + $0x40] sm:$0xff]
    %v566 = vld [vmem:[#allocation2 + $0x48] sm:$0xff]
    %v567 = vld [vmem:[#allocation2 + $0x50] sm:$0xff]
    %v568 = vld [vmem:[#allocation2 + $0x58] sm:$0xff]
    %v569 = vld [vmem:[#allocation2 + $0x60] sm:$0xff]
    %v570 = vld [vmem:[#allocation2 + $0x68] sm:$0xff]
    %v571 = vld [vmem:[#allocation2 + $0x70] sm:$0xff]
    %v572 = vld [vmem:[#allocation2 + $0x78] sm:$0xff]
    %v573 = vmul.f32 %v557, 2.0
    %v574 = vmul.f32 %v558, 2.0
    %v575 = vmul.f32 %v559, 2.0
    %v576 = vmul.f32 %v560, 2.0
    %v577 = vmul.f32 %v561, 2.0
    %v578 = vmul.f32 %v562, 2.0
    %v579 = vmul.f32 %v563, 2.0
    %v580 = vmul.f32 %v564, 2.0
    %v581 = vmul.f32 %v565, 2.0
    %v582 = vmul.f32 %v566, 2.0
    %v583 = vmul.f32 %v567, 2.0
    %v584 = vmul.f32 %v568, 2.0
    %v585 = vmul.f32 %v569, 2.0
    %v586 = vmul.f32 %v570, 2.0
    %v587 = vmul.f32 %v571, 2.0
    %v588 = vmul.f32 %v572, 2.0
    %v589 = vadd.f32 %v573, %v541
    %v590 = vadd.f32 %v574, %v542
    %v591 = vadd.f32 %v575, %v543
    %v592 = vadd.f32 %v576, %v544
    %v593 = vadd.f32 %v577, %v545
    %v594 = vadd.f32 %v578, %v546
    %v595 = vadd.f32 %v579, %v547
    %v596 = vadd.f32 %v580, %v548
    %v597 = vadd.f32 %v581, %v549
    %v598 = vadd.f32 %v582, %v550
    %v599 = vadd.f32 %v583, %v551
    %v600 = vadd.f32 %v584, %v552
    %v601 = vadd.f32 %v585, %v553
    %v602 = vadd.f32 %v586, %v554
    %v603 = vadd.f32 %v587, %v555
    %v604 = vadd.f32 %v588, %v556
    %v605 = vmax.f32 %v589, 1e-12
    %v606 = vmax.f32 %v590, 1e-12
    %v607 = vmax.f32 %v591, 1e-12
    %v608 = vmax.f32 %v592, 1e-12
    %v609 = vmax.f32 %v593, 1e-12
    %v610 = vmax.f32 %v594, 1e-12
    %v611 = vmax.f32 %v595, 1e-12
    %v612 = vmax.f32 %v596, 1e-12
    %v613 = vmax.f32 %v597, 1e-12
    %v614 = vmax.f32 %v598, 1e-12
    %v615 = vmax.f32 %v599, 1e-12
    %v616 = vmax.f32 %v600, 1e-12
    %v617 = vmax.f32 %v601, 1e-12
    %v618 = vmax.f32 %v602, 1e-12
    %v619 = vmax.f32 %v603, 1e-12
    %v620 = vmax.f32 %v604, 1e-12
    %v621 = vrsqrt.pop %v605
    %v622 = vmul.f32 %v605, %v621
    %vm623 = vcmp.eq.f32.partialorder %v605, inf
    %v624 = vsel %vm623, %v605, %v622
    %vm625 = vcmp.eq.f32.partialorder %v605, 0.0
    %v626 = vand.u32 %v605, 2147483648
    %v627 = vsel %vm625, %v626, %v624
    %v628 = vrsqrt.pop %v606
    %v629 = vmul.f32 %v606, %v628
    %vm630 = vcmp.eq.f32.partialorder %v606, inf
    %v631 = vsel %vm630, %v606, %v629
    %vm632 = vcmp.eq.f32.partialorder %v606, 0.0
    %v633 = vand.u32 %v606, 2147483648
    %v634 = vsel %vm632, %v633, %v631
    %v635 = vrsqrt.pop %v607
    %v636 = vmul.f32 %v607, %v635
    %vm637 = vcmp.eq.f32.partialorder %v607, inf
    %v638 = vsel %vm637, %v607, %v636
    %vm639 = vcmp.eq.f32.partialorder %v607, 0.0
    %v640 = vand.u32 %v607, 2147483648
    %v641 = vsel %vm639, %v640, %v638
    %v642 = vrsqrt.pop %v608
    %v643 = vmul.f32 %v608, %v642
    %vm644 = vcmp.eq.f32.partialorder %v608, inf
    %v645 = vsel %vm644, %v608, %v643
    %vm646 = vcmp.eq.f32.partialorder %v608, 0.0
    %v647 = vand.u32 %v608, 2147483648
    %v648 = vsel %vm646, %v647, %v645
    %v649 = vrsqrt.pop %v609
    %v650 = vmul.f32 %v609, %v649
    %vm651 = vcmp.eq.f32.partialorder %v609, inf
    %v652 = vsel %vm651, %v609, %v650
    %vm653 = vcmp.eq.f32.partialorder %v609, 0.0
    %v654 = vand.u32 %v609, 2147483648
    %v655 = vsel %vm653, %v654, %v652
    %v656 = vrsqrt.pop %v610
    %v657 = vmul.f32 %v610, %v656
    %vm658 = vcmp.eq.f32.partialorder %v610, inf
    %v659 = vsel %vm658, %v610, %v657
    %vm660 = vcmp.eq.f32.partialorder %v610, 0.0
    %v661 = vand.u32 %v610, 2147483648
    %v662 = vsel %vm660, %v661, %v659
    %v663 = vrsqrt.pop %v611
    %v664 = vmul.f32 %v611, %v663
    %vm665 = vcmp.eq.f32.partialorder %v611, inf
    %v666 = vsel %vm665, %v611, %v664
    %vm667 = vcmp.eq.f32.partialorder %v611, 0.0
    %v668 = vand.u32 %v611, 2147483648
    %v669 = vsel %vm667, %v668, %v666
    %v670 = vrsqrt.pop %v612
    %v671 = vmul.f32 %v612, %v670
    %vm672 = vcmp.eq.f32.partialorder %v612, inf
    %v673 = vsel %vm672, %v612, %v671
    %vm674 = vcmp.eq.f32.partialorder %v612, 0.0
    %v675 = vand.u32 %v612, 2147483648
    %v676 = vsel %vm674, %v675, %v673
    %v677 = vrsqrt.pop %v613
    %v678 = vmul.f32 %v613, %v677
    %vm679 = vcmp.eq.f32.partialorder %v613, inf
    %v680 = vsel %vm679, %v613, %v678
    %vm681 = vcmp.eq.f32.partialorder %v613, 0.0
    %v682 = vand.u32 %v613, 2147483648
    %v683 = vsel %vm681, %v682, %v680
    %v684 = vrsqrt.pop %v614
    %v685 = vmul.f32 %v614, %v684
    %vm686 = vcmp.eq.f32.partialorder %v614, inf
    %v687 = vsel %vm686, %v614, %v685
    %vm688 = vcmp.eq.f32.partialorder %v614, 0.0
    %v689 = vand.u32 %v614, 2147483648
    %v690 = vsel %vm688, %v689, %v687
    %v691 = vrsqrt.pop %v615
    %v692 = vmul.f32 %v615, %v691
    %vm693 = vcmp.eq.f32.partialorder %v615, inf
    %v694 = vsel %vm693, %v615, %v692
    %vm695 = vcmp.eq.f32.partialorder %v615, 0.0
    %v696 = vand.u32 %v615, 2147483648
    %v697 = vsel %vm695, %v696, %v694
    %v698 = vrsqrt.pop %v616
    %v699 = vmul.f32 %v616, %v698
    %vm700 = vcmp.eq.f32.partialorder %v616, inf
    %v701 = vsel %vm700, %v616, %v699
    %vm702 = vcmp.eq.f32.partialorder %v616, 0.0
    %v703 = vand.u32 %v616, 2147483648
    %v704 = vsel %vm702, %v703, %v701
    %v705 = vrsqrt.pop %v617
    %v706 = vmul.f32 %v617, %v705
    %vm707 = vcmp.eq.f32.partialorder %v617, inf
    %v708 = vsel %vm707, %v617, %v706
    %vm709 = vcmp.eq.f32.partialorder %v617, 0.0
    %v710 = vand.u32 %v617, 2147483648
    %v711 = vsel %vm709, %v710, %v708
    %v712 = vrsqrt.pop %v618
    %v713 = vmul.f32 %v618, %v712
    %vm714 = vcmp.eq.f32.partialorder %v618, inf
    %v715 = vsel %vm714, %v618, %v713
    %vm716 = vcmp.eq.f32.partialorder %v618, 0.0
    %v717 = vand.u32 %v618, 2147483648
    %v718 = vsel %vm716, %v717, %v715
    %v719 = vrsqrt.pop %v619
    %v720 = vmul.f32 %v619, %v719
    %vm721 = vcmp.eq.f32.partialorder %v619, inf
    %v722 = vsel %vm721, %v619, %v720
    %vm723 = vcmp.eq.f32.partialorder %v619, 0.0
    %v724 = vand.u32 %v619, 2147483648
    %v725 = vsel %vm723, %v724, %v722
    %v726 = vrsqrt.pop %v620
    %v727 = vmul.f32 %v620, %v726
    %vm728 = vcmp.eq.f32.partialorder %v620, inf
    %v729 = vsel %vm728, %v620, %v727
    %vm730 = vcmp.eq.f32.partialorder %v620, 0.0
    %v731 = vand.u32 %v620, 2147483648
    %v732 = vsel %vm730, %v731, %v729
    %v733 = vld [vmem:[#allocation3] sm:$0xff]
    %v734 = vld [vmem:[#allocation3 + $0x8] sm:$0xff]
    %v735 = vld [vmem:[#allocation3 + $0x10] sm:$0xff]
    %v736 = vld [vmem:[#allocation3 + $0x18] sm:$0xff]
    %v737 = vld [vmem:[#allocation3 + $0x20] sm:$0xff]
    %v738 = vld [vmem:[#allocation3 + $0x28] sm:$0xff]
    %v739 = vld [vmem:[#allocation3 + $0x30] sm:$0xff]
    %v740 = vld [vmem:[#allocation3 + $0x38] sm:$0xff]
    %v741 = vld [vmem:[#allocation3 + $0x40] sm:$0xff]
    %v742 = vld [vmem:[#allocation3 + $0x48] sm:$0xff]
    %v743 = vld [vmem:[#allocation3 + $0x50] sm:$0xff]
    %v744 = vld [vmem:[#allocation3 + $0x58] sm:$0xff]
    %v745 = vld [vmem:[#allocation3 + $0x60] sm:$0xff]
    %v746 = vld [vmem:[#allocation3 + $0x68] sm:$0xff]
    %v747 = vld [vmem:[#allocation3 + $0x70] sm:$0xff]
    %v748 = vld [vmem:[#allocation3 + $0x78] sm:$0xff]
    %v749 = vmul.f32 %v733, 2.0
    %v750 = vmul.f32 %v734, 2.0
    %v751 = vmul.f32 %v735, 2.0
    %v752 = vmul.f32 %v736, 2.0
    %v753 = vmul.f32 %v737, 2.0
    %v754 = vmul.f32 %v738, 2.0
    %v755 = vmul.f32 %v739, 2.0
    %v756 = vmul.f32 %v740, 2.0
    %v757 = vmul.f32 %v741, 2.0
    %v758 = vmul.f32 %v742, 2.0
    %v759 = vmul.f32 %v743, 2.0
    %v760 = vmul.f32 %v744, 2.0
    %v761 = vmul.f32 %v745, 2.0
    %v762 = vmul.f32 %v746, 2.0
    %v763 = vmul.f32 %v747, 2.0
    %v764 = vmul.f32 %v748, 2.0
    %v765 = vadd.f32 %v749, %v541
    %v766 = vadd.f32 %v750, %v542
    %v767 = vadd.f32 %v751, %v543
    %v768 = vadd.f32 %v752, %v544
    %v769 = vadd.f32 %v753, %v545
    %v770 = vadd.f32 %v754, %v546
    %v771 = vadd.f32 %v755, %v547
    %v772 = vadd.f32 %v756, %v548
    %v773 = vadd.f32 %v757, %v549
    %v774 = vadd.f32 %v758, %v550
    %v775 = vadd.f32 %v759, %v551
    %v776 = vadd.f32 %v760, %v552
    %v777 = vadd.f32 %v761, %v553
    %v778 = vadd.f32 %v762, %v554
    %v779 = vadd.f32 %v763, %v555
    %v780 = vadd.f32 %v764, %v556
    %v781 = vmax.f32 %v765, 1e-12
    %v782 = vmax.f32 %v766, 1e-12
    %v783 = vmax.f32 %v767, 1e-12
    %v784 = vmax.f32 %v768, 1e-12
    %v785 = vmax.f32 %v769, 1e-12
    %v786 = vmax.f32 %v770, 1e-12
    %v787 = vmax.f32 %v771, 1e-12
    %v788 = vmax.f32 %v772, 1e-12
    %v789 = vmax.f32 %v773, 1e-12
    %v790 = vmax.f32 %v774, 1e-12
    %v791 = vmax.f32 %v775, 1e-12
    %v792 = vmax.f32 %v776, 1e-12
    %v793 = vmax.f32 %v777, 1e-12
    %v794 = vmax.f32 %v778, 1e-12
    %v795 = vmax.f32 %v779, 1e-12
    %v796 = vmax.f32 %v780, 1e-12
    %v797 = vrsqrt.pop %v781
    %v798 = vmul.f32 %v781, %v797
    %vm799 = vcmp.eq.f32.partialorder %v781, inf
    %v800 = vsel %vm799, %v781, %v798
    %vm801 = vcmp.eq.f32.partialorder %v781, 0.0
    %v802 = vand.u32 %v781, 2147483648
    %v803 = vsel %vm801, %v802, %v800
    %v804 = vrsqrt.pop %v782
    %v805 = vmul.f32 %v782, %v804
    %vm806 = vcmp.eq.f32.partialorder %v782, inf
    %v807 = vsel %vm806, %v782, %v805
    %vm808 = vcmp.eq.f32.partialorder %v782, 0.0
    %v809 = vand.u32 %v782, 2147483648
    %v810 = vsel %vm808, %v809, %v807
    %v811 = vrsqrt.pop %v783
    %v812 = vmul.f32 %v783, %v811
    %vm813 = vcmp.eq.f32.partialorder %v783, inf
    %v814 = vsel %vm813, %v783, %v812
    %vm815 = vcmp.eq.f32.partialorder %v783, 0.0
    %v816 = vand.u32 %v783, 2147483648
    %v817 = vsel %vm815, %v816, %v814
    %v818 = vrsqrt.pop %v784
    %v819 = vmul.f32 %v784, %v818
    %vm820 = vcmp.eq.f32.partialorder %v784, inf
    %v821 = vsel %vm820, %v784, %v819
    %vm822 = vcmp.eq.f32.partialorder %v784, 0.0
    %v823 = vand.u32 %v784, 2147483648
    %v824 = vsel %vm822, %v823, %v821
    %v825 = vrsqrt.pop %v785
    %v826 = vmul.f32 %v785, %v825
    %vm827 = vcmp.eq.f32.partialorder %v785, inf
    %v828 = vsel %vm827, %v785, %v826
    %vm829 = vcmp.eq.f32.partialorder %v785, 0.0
    %v830 = vand.u32 %v785, 2147483648
    %v831 = vsel %vm829, %v830, %v828
    %v832 = vrsqrt.pop %v786
    %v833 = vmul.f32 %v786, %v832
    %vm834 = vcmp.eq.f32.partialorder %v786, inf
    %v835 = vsel %vm834, %v786, %v833
    %vm836 = vcmp.eq.f32.partialorder %v786, 0.0
    %v837 = vand.u32 %v786, 2147483648
    %v838 = vsel %vm836, %v837, %v835
    %v839 = vrsqrt.pop %v787
    %v840 = vmul.f32 %v787, %v839
    %vm841 = vcmp.eq.f32.partialorder %v787, inf
    %v842 = vsel %vm841, %v787, %v840
    %vm843 = vcmp.eq.f32.partialorder %v787, 0.0
    %v844 = vand.u32 %v787, 2147483648
    %v845 = vsel %vm843, %v844, %v842
    %v846 = vrsqrt.pop %v788
    %v847 = vmul.f32 %v788, %v846
    %vm848 = vcmp.eq.f32.partialorder %v788, inf
    %v849 = vsel %vm848, %v788, %v847
    %vm850 = vcmp.eq.f32.partialorder %v788, 0.0
    %v851 = vand.u32 %v788, 2147483648
    %v852 = vsel %vm850, %v851, %v849
    %v853 = vrsqrt.pop %v789
    %v854 = vmul.f32 %v789, %v853
    %vm855 = vcmp.eq.f32.partialorder %v789, inf
    %v856 = vsel %vm855, %v789, %v854
    %vm857 = vcmp.eq.f32.partialorder %v789, 0.0
    %v858 = vand.u32 %v789, 2147483648
    %v859 = vsel %vm857, %v858, %v856
    %v860 = vrsqrt.pop %v790
    %v861 = vmul.f32 %v790, %v860
    %vm862 = vcmp.eq.f32.partialorder %v790, inf
    %v863 = vsel %vm862, %v790, %v861
    %vm864 = vcmp.eq.f32.partialorder %v790, 0.0
    %v865 = vand.u32 %v790, 2147483648
    %v866 = vsel %vm864, %v865, %v863
    %v867 = vrsqrt.pop %v791
    %v868 = vmul.f32 %v791, %v867
    %vm869 = vcmp.eq.f32.partialorder %v791, inf
    %v870 = vsel %vm869, %v791, %v868
    %vm871 = vcmp.eq.f32.partialorder %v791, 0.0
    %v872 = vand.u32 %v791, 2147483648
    %v873 = vsel %vm871, %v872, %v870
    %v874 = vrsqrt.pop %v792
    %v875 = vmul.f32 %v792, %v874
    %vm876 = vcmp.eq.f32.partialorder %v792, inf
    %v877 = vsel %vm876, %v792, %v875
    %vm878 = vcmp.eq.f32.partialorder %v792, 0.0
    %v879 = vand.u32 %v792, 2147483648
    %v880 = vsel %vm878, %v879, %v877
    %v881 = vrsqrt.pop %v793
    %v882 = vmul.f32 %v793, %v881
    %vm883 = vcmp.eq.f32.partialorder %v793, inf
    %v884 = vsel %vm883, %v793, %v882
    %vm885 = vcmp.eq.f32.partialorder %v793, 0.0
    %v886 = vand.u32 %v793, 2147483648
    %v887 = vsel %vm885, %v886, %v884
    %v888 = vrsqrt.pop %v794
    %v889 = vmul.f32 %v794, %v888
    %vm890 = vcmp.eq.f32.partialorder %v794, inf
    %v891 = vsel %vm890, %v794, %v889
    %vm892 = vcmp.eq.f32.partialorder %v794, 0.0
    %v893 = vand.u32 %v794, 2147483648
    %v894 = vsel %vm892, %v893, %v891
    %v895 = vrsqrt.pop %v795
    %v896 = vmul.f32 %v795, %v895
    %vm897 = vcmp.eq.f32.partialorder %v795, inf
    %v898 = vsel %vm897, %v795, %v896
    %vm899 = vcmp.eq.f32.partialorder %v795, 0.0
    %v900 = vand.u32 %v795, 2147483648
    %v901 = vsel %vm899, %v900, %v898
    %v902 = vrsqrt.pop %v796
    %v903 = vmul.f32 %v796, %v902
    %vm904 = vcmp.eq.f32.partialorder %v796, inf
    %v905 = vsel %vm904, %v796, %v903
    %vm906 = vcmp.eq.f32.partialorder %v796, 0.0
    %v907 = vand.u32 %v796, 2147483648
    %v908 = vsel %vm906, %v907, %v905
    %v909 = vsub.f32 %v627, %v803
    %v910 = vsub.f32 %v634, %v810
    %v911 = vsub.f32 %v641, %v817
    %v912 = vsub.f32 %v648, %v824
    %v913 = vsub.f32 %v655, %v831
    %v914 = vsub.f32 %v662, %v838
    %v915 = vsub.f32 %v669, %v845
    %v916 = vsub.f32 %v676, %v852
    %v917 = vsub.f32 %v683, %v859
    %v918 = vsub.f32 %v690, %v866
    %v919 = vsub.f32 %v697, %v873
    %v920 = vsub.f32 %v704, %v880
    %v921 = vsub.f32 %v711, %v887
    %v922 = vsub.f32 %v718, %v894
    %v923 = vsub.f32 %v725, %v901
    %v924 = vsub.f32 %v732, %v908
    %v925 = vadd.f32 %v909, 0.5
    %v926 = vadd.f32 %v910, 0.5
    %v927 = vadd.f32 %v911, 0.5
    %v928 = vadd.f32 %v912, 0.5
    %v929 = vadd.f32 %v913, 0.5
    %v930 = vadd.f32 %v914, 0.5
    %v931 = vadd.f32 %v915, 0.5
    %v932 = vadd.f32 %v916, 0.5
    %v933 = vadd.f32 %v917, 0.5
    %v934 = vadd.f32 %v918, 0.5
    %v935 = vadd.f32 %v919, 0.5
    %v936 = vadd.f32 %v920, 0.5
    %v937 = vadd.f32 %v921, 0.5
    %v938 = vadd.f32 %v922, 0.5
    %v939 = vadd.f32 %v923, 0.5
    %v940 = vadd.f32 %v924, 0.5
    %v941 = vmax.f32 %v925, 0.0
    %v942 = vmax.f32 %v926, 0.0
    %v943 = vmax.f32 %v927, 0.0
    %v944 = vmax.f32 %v928, 0.0
    %v945 = vmax.f32 %v929, 0.0
    %v946 = vmax.f32 %v930, 0.0
    %v947 = vmax.f32 %v931, 0.0
    %v948 = vmax.f32 %v932, 0.0
    %v949 = vmax.f32 %v933, 0.0
    %v950 = vmax.f32 %v934, 0.0
    %v951 = vmax.f32 %v935, 0.0
    %v952 = vmax.f32 %v936, 0.0
    %v953 = vmax.f32 %v937, 0.0
    %v954 = vmax.f32 %v938, 0.0
    %v955 = vmax.f32 %v939, 0.0
    %v956 = vmax.f32 %v940, 0.0
    %957 = vst.msk [vmem:[%s6] sm:$0xff] %vm441, %v941
    %958 = vst.msk [vmem:[%s6 + $0x8] sm:$0xff] %vm441, %v942
    %959 = vst.msk [vmem:[%s6 + $0x10] sm:$0xff] %vm441, %v943
    %960 = vst.msk [vmem:[%s6 + $0x18] sm:$0xff] %vm441, %v944
    %961 = vst.msk [vmem:[%s6 + $0x20] sm:$0xff] %vm441, %v945
    %962 = vst.msk [vmem:[%s6 + $0x28] sm:$0xff] %vm441, %v946
    %963 = vst.msk [vmem:[%s6 + $0x30] sm:$0xff] %vm441, %v947
    %964 = vst.msk [vmem:[%s6 + $0x38] sm:$0xff] %vm441, %v948
    %965 = vst.msk [vmem:[%s6 + $0x40] sm:$0xff] %vm441, %v949
    %966 = vst.msk [vmem:[%s6 + $0x48] sm:$0xff] %vm441, %v950
    %967 = vst.msk [vmem:[%s6 + $0x50] sm:$0xff] %vm441, %v951
    %968 = vst.msk [vmem:[%s6 + $0x58] sm:$0xff] %vm441, %v952
    %969 = vst.msk [vmem:[%s6 + $0x60] sm:$0xff] %vm441, %v953
    %970 = vst.msk [vmem:[%s6 + $0x68] sm:$0xff] %vm441, %v954
    %971 = vst.msk [vmem:[%s6 + $0x70] sm:$0xff] %vm441, %v955
    %972 = vst.msk [vmem:[%s6 + $0x78] sm:$0xff] %vm441, %v956
  $region33: #{batch_hard_triplet_loss.1} parent=0 // pred_fallthru
    _
  // Predicated region
  $region34: #{batch_hard_triplet_loss.1} parent=0 // pred_check
    _
  $region35: #{batch_hard_triplet_loss.1} parent=0 // pred_check_branch
    %974 = sbr.rel (0) target = $region37
  $region36: #{batch_hard_triplet_loss.1} parent=0 // pred_region
    _
  $region37: #{batch_hard_triplet_loss.1} parent=0 // pred_fallthru
    _
  // Predicated region
  $region38: #{batch_hard_triplet_loss.1} parent=0 // pred_check
    _
  $region39: #{batch_hard_triplet_loss.1} parent=0 // pred_check_branch
    %976 = sbr.rel (0) target = $region41
  $region40: #{batch_hard_triplet_loss.1} parent=0 // pred_region
    _
  $region41: #{batch_hard_triplet_loss.1} parent=0 // pred_fallthru
    _

</llo_original>
